<compile_context>
chip_gen: v7x
topology: tpu7x:2x2x1
jax: 0.10.0
libtpu: 0.0.40
codegen_flags: <defaults>
</compile_context>

<pallas_src>
import math
from collections import OrderedDict

import numpy as np
import jax
import jax.numpy as jnp
from jax.experimental import pallas as pl
from jax.experimental.pallas import tpu as pltpu


def _round_up(x, m):
    return ((x + m - 1) // m) * m


# ----------------------------------------------------------------------------
# Pallas kernel: single-step fused MLP over ALL hypernetwork heads at once
# ----------------------------------------------------------------------------
def make_fused_hyper_kernel(num_linears):
    """Kernel refs: (z, W0, b0, W1, b1, ..., W_last, b_last, out).

    All refs are whole arrays resident in VMEM (no grid).  Layer 0 is a wide
    (F, N*H) matmul, hidden layers are block-diagonal (N*H, N*H), the output
    layer is (N*H, OUT_PAD) with the nets' outputs concatenated along lanes.
    ReLU after every layer except the outermost (outermost_linear=True).
    """

    def kernel(*refs):
        z_ref = refs[0]
        o_ref = refs[-1]
        p_refs = refs[1:-1]
        h = z_ref[...].astype(jnp.float32)                    # (B_pad, F)
        for li in range(num_linears):
            w = p_refs[2 * li][...]                           # (in, out)
            b = p_refs[2 * li + 1][...]                       # (1, out)
            h = jnp.dot(h, w, preferred_element_type=jnp.float32) + b
            if li < num_linears - 1:
                h = jnp.maximum(h, 0.0)                       # ReLU (VPU)
        o_ref[...] = h.astype(o_ref.dtype)                    # (B_pad, OUT_PAD)

    return kernel


def fused_hyper_forward(z, fused_layers):
    """Run ALL per-parameter hypernetwork MLPs with one grid-less pallas_call.

    Args:
      z: (B, F) float32 embedding.
      fused_layers: list of (W, b), W: (in, out), b: (1, out) — layer 0 wide,
        hidden layers block-diagonal, last layer block matrix padded to OUT_PAD.
    Returns:
      (B, OUT_PAD) float32; net i's output lives in columns
      [col_off_i : col_off_i + out_dim_i].
    """
    B, F = z.shape
    B_pad = max(_round_up(B, 8), 8)                 # full-sublane activations/stores
    if B_pad != B:
        z = jnp.pad(z, ((0, B_pad - B), (0, 0)))
    out_pad = fused_layers[-1][0].shape[-1]
    num_linears = len(fused_layers)

    operands = [z]
    for (w, b) in fused_layers:
        operands.append(w)
        operands.append(b)

    # --- VMEM budget guardrail (v7x: 64 MiB physical, 32 MiB scoped default) ---
    vmem_bytes = sum(int(op.size) * jnp.dtype(op.dtype).itemsize for op in operands)
    vmem_bytes += B_pad * out_pad * 4
    assert vmem_bytes < 40 * 1024 * 1024, (
        "stacked hypernetwork weights exceed resident-VMEM budget; "
        "fall back to tiling over nets / K")
    vmem_limit = int(min(max(4 * vmem_bytes, 16 << 20), 64 << 20))

    flops = 2 * B_pad * sum(w.shape[0] * w.shape[1] for (w, _) in fused_layers)
    bytes_accessed = vmem_bytes + B_pad * F * 4

    out = pl.pallas_call(
        make_fused_hyper_kernel(num_linears),
        out_shape=jax.ShapeDtypeStruct((B_pad, out_pad), jnp.float32),
        # No grid: single step, whole arrays resident in VMEM.
        in_specs=[pl.BlockSpec(memory_space=pltpu.MemorySpace.VMEM)
                  for _ in operands],
        out_specs=pl.BlockSpec(memory_space=pltpu.MemorySpace.VMEM),
        compiler_params=pltpu.CompilerParams(vmem_limit_bytes=vmem_limit),
        cost_estimate=pl.CostEstimate(
            flops=flops, transcendentals=0, bytes_accessed=bytes_accessed),
    )(*operands)
    return out[:B]


# ----------------------------------------------------------------------------
# Deterministic parameter construction (mirrors the PyTorch __init__ scheme)
# ----------------------------------------------------------------------------
def _kaiming_normal(key, out_f, in_f):
    # kaiming_normal_(mode='fan_in', nonlinearity='relu'): std = sqrt(2 / fan_in)
    std = math.sqrt(2.0 / in_f)
    return std * jax.random.normal(key, (out_f, in_f), dtype=jnp.float32)


def _linear_default_bias(key, out_f, in_f):
    # nn.Linear default bias init: U(-1/sqrt(fan_in), 1/sqrt(fan_in))
    bound = 1.0 / math.sqrt(in_f)
    return jax.random.uniform(key, (out_f,), jnp.float32, -bound, bound)


def build_hypernetwork_params(key, hypo_param_shapes, hyper_in, hyper_hidden_layers,
                              hyper_hidden):
    """One FCBlock per hypo parameter (PyTorch (out,in) layout) with HyperNetwork's
    special last-layer init (kaiming/100 weight, uniform bias)."""
    nets = OrderedDict()
    for name, shape in hypo_param_shapes:
        out_dim = int(math.prod(shape))
        layer_dims = ([(hyper_in, hyper_hidden)] +
                      [(hyper_hidden, hyper_hidden)] * hyper_hidden_layers +
                      [(hyper_hidden, out_dim)])
        layers = []
        for li, (fin, fout) in enumerate(layer_dims):
            key, kw, kb = jax.random.split(key, 3)
            W = _kaiming_normal(kw, fout, fin)            # init_weights_normal
            is_last = (li == len(layer_dims) - 1)
            if is_last:
                W = W / 100.0                             # hyper_{weight,bias}_init
                if 'weight' in name:
                    bound = 1.0 / shape[-1]               # 1 / in_features_main_net
                else:  # 'bias' in name
                    bound = 1.0 / fin                     # 1 / fan_in of last layer
                b = jax.random.uniform(kb, (fout,), jnp.float32, -bound, bound)
            else:
                b = _linear_default_bias(kb, fout, fin)   # nn.Linear default bias
            layers.append((W, b))
        nets[name] = layers
    return nets


def fuse_hypernetwork_params(nets):
    """Fuse all per-net MLPs into one wide MLP (build-time, numpy):

      layer 0:  (F, N*H)   = concat of transposed per-net first layers
      hidden:   (N*H, N*H) = block-diagonal
      output:   (N*H, OUT_PAD) block matrix; columns = concat of nets' outputs,
                zero-padded at the tail to a multiple of 128.

    Returns (fused_layers, col_offsets, OUT_PAD).
    """
    net_list = list(nets.values())
    N = len(net_list)
    num_linears = len(net_list[0])
    H = net_list[0][0][0].shape[0]          # hidden features
    out_dims = [layers[-1][0].shape[0] for layers in net_list]
    col_offsets = np.concatenate([[0], np.cumsum(out_dims)]).astype(np.int64)
    total_out = int(col_offsets[-1])
    out_pad = _round_up(max(total_out, 128), 128)

    fused = []

    # Layer 0: wide concat along the out axis.
    W0 = np.concatenate(
        [np.asarray(layers[0][0]).T for layers in net_list], axis=1)     # (F, N*H)
    b0 = np.concatenate(
        [np.asarray(layers[0][1]) for layers in net_list]).reshape(1, -1)
    fused.append((jnp.asarray(W0), jnp.asarray(b0)))

    # Hidden layers: block-diagonal.
    for li in range(1, num_linears - 1):
        Wd = np.zeros((N * H, N * H), dtype=np.float32)
        bs = []
        for i, layers in enumerate(net_list):
            W, b = layers[li]
            Wd[i * H:(i + 1) * H, i * H:(i + 1) * H] = np.asarray(W).T
            bs.append(np.asarray(b))
        bd = np.concatenate(bs).reshape(1, -1)
        fused.append((jnp.asarray(Wd), jnp.asarray(bd)))

    # Output layer: block matrix, columns concatenated per net, tail zero-padded.
    Wl = np.zeros((N * H, out_pad), dtype=np.float32)
    bl = np.zeros((1, out_pad), dtype=np.float32)
    for i, layers in enumerate(net_list):
        W, b = layers[-1]
        o0, o1 = int(col_offsets[i]), int(col_offsets[i + 1])
        Wl[i * H:(i + 1) * H, o0:o1] = np.asarray(W).T
        bl[0, o0:o1] = np.asarray(b)
    fused.append((jnp.asarray(Wl), jnp.asarray(bl)))

    return fused, col_offsets, out_pad


def hypernetwork_forward(z, fused_layers, hypo_param_shapes, col_offsets):
    """Returns OrderedDict name -> (B, *param_shape), like HyperNetwork.forward."""
    B = z.shape[0]
    flat = fused_hyper_forward(z, fused_layers)          # (B, OUT_PAD)
    params = OrderedDict()
    for i, (name, shape) in enumerate(hypo_param_shapes):
        out_dim = int(math.prod(shape))
        o0 = int(col_offsets[i])
        params[name] = flat[:, o0:o0 + out_dim].reshape((B,) + tuple(shape))
    return params


# Pure-JAX reference for the same math (correctness check).
def hyper_mlp_reference(z, layers):
    h = z
    for li, (w, b) in enumerate(layers):
        h = jnp.matmul(h, w.T, precision=jax.lax.Precision.HIGHEST) + b[None, :]
        if li < len(layers) - 1:
            h = jnp.maximum(h, 0.0)
    return h


if __name__ == "__main__":
    # Hypo module: FCBlock(in_features=2, out_features=3, num_hidden_layers=1,
    #                      hidden_features=16)  ->  meta parameters:
    hypo_param_shapes = [
        ("net.0.0.weight", (16, 2)),
        ("net.0.0.bias",   (16,)),
        ("net.1.0.weight", (16, 16)),
        ("net.1.0.bias",   (16,)),
        ("net.2.0.weight", (3, 16)),
        ("net.2.0.bias",   (3,)),
    ]
    hyper_in_features = 8
    hyper_hidden_layers = 1
    hyper_hidden_features = 32
    batch = 2

    key = jax.random.PRNGKey(0)
    key, kz = jax.random.split(key)
    z = jax.random.normal(kz, (batch, hyper_in_features), dtype=jnp.float32)

    nets = build_hypernetwork_params(key, hypo_param_shapes, hyper_in_features,
                                     hyper_hidden_layers, hyper_hidden_features)
    fused_layers, col_offsets, out_pad = fuse_hypernetwork_params(nets)

    # jit the whole forward so the single pallas_call trace is cached.
    forward_jit = jax.jit(
        lambda zz, fl: hypernetwork_forward(zz, fl, hypo_param_shapes, col_offsets))

    params = forward_jit(z, fused_layers)
    params = jax.block_until_ready(params)

    # Verify shapes and values against the pure-JAX per-net reference.
    for name, shape in hypo_param_shapes:
        out = params[name]
        assert out.shape == (batch,) + tuple(shape), (name, out.shape)
        ref = hyper_mlp_reference(z, nets[name]).reshape((batch,) + tuple(shape))
        assert jnp.allclose(out, ref, atol=1e-5, rtol=1e-4), name

    print("KERNEL_OK")
</pallas_src>

<mosaic_0001>
module attributes {stable_mosaic.version = 11 : i64} {
  func.func @kernel(%arg0: memref<8x8xf32, #tpu.memory_space<vmem>>, %arg1: memref<8x192xf32, #tpu.memory_space<vmem>>, %arg2: memref<1x192xf32, #tpu.memory_space<vmem>>, %arg3: memref<192x192xf32, #tpu.memory_space<vmem>>, %arg4: memref<1x192xf32, #tpu.memory_space<vmem>>, %arg5: memref<192x384xf32, #tpu.memory_space<vmem>>, %arg6: memref<1x384xf32, #tpu.memory_space<vmem>>, %arg7: memref<8x384xf32, #tpu.memory_space<vmem>>) attributes {dimension_semantics = [], scalar_prefetch = 0 : i64, scratch_operands = 0 : i64, tpu.core_type = #tpu.core_type<tc>} {
    %c0 = arith.constant 0 : index
    %c0_0 = arith.constant 0 : index
    %0 = vector.load %arg0[%c0, %c0_0] : memref<8x8xf32, #tpu.memory_space<vmem>>, vector<8x8xf32>
    %c0_1 = arith.constant 0 : index
    %c0_2 = arith.constant 0 : index
    %1 = vector.load %arg1[%c0_1, %c0_2] : memref<8x192xf32, #tpu.memory_space<vmem>>, vector<8x192xf32>
    %c0_3 = arith.constant 0 : index
    %c0_4 = arith.constant 0 : index
    %2 = vector.load %arg2[%c0_3, %c0_4] : memref<1x192xf32, #tpu.memory_space<vmem>>, vector<1x192xf32>
    %cst = arith.constant dense<0.000000e+00> : vector<8x192xf32>
    %3 = tpu.matmul %0, %1, %cst {dimension_numbers = #tpu.dot_dimension_numbers<[1], [0], [0], [1], [0, 0, 1, 1], [], []>} : vector<8x8xf32>, vector<8x192xf32>, vector<8x192xf32> -> vector<8x192xf32>
    %4 = vector.broadcast %2 : vector<1x192xf32> to vector<8x192xf32>
    %5 = arith.addf %3, %4 : vector<8x192xf32>
    %cst_5 = arith.constant 0.000000e+00 : f32
    %6 = vector.broadcast %cst_5 : f32 to vector<8x192xf32>
    %7 = arith.maximumf %5, %6 : vector<8x192xf32>
    %c0_6 = arith.constant 0 : index
    %c0_7 = arith.constant 0 : index
    %8 = vector.load %arg3[%c0_6, %c0_7] : memref<192x192xf32, #tpu.memory_space<vmem>>, vector<192x192xf32>
    %c0_8 = arith.constant 0 : index
    %c0_9 = arith.constant 0 : index
    %9 = vector.load %arg4[%c0_8, %c0_9] : memref<1x192xf32, #tpu.memory_space<vmem>>, vector<1x192xf32>
    %cst_10 = arith.constant dense<0.000000e+00> : vector<8x192xf32>
    %10 = tpu.matmul %7, %8, %cst_10 {dimension_numbers = #tpu.dot_dimension_numbers<[1], [0], [0], [1], [0, 0, 1, 1], [], []>} : vector<8x192xf32>, vector<192x192xf32>, vector<8x192xf32> -> vector<8x192xf32>
    %11 = vector.broadcast %9 : vector<1x192xf32> to vector<8x192xf32>
    %12 = arith.addf %10, %11 : vector<8x192xf32>
    %cst_11 = arith.constant 0.000000e+00 : f32
    %13 = vector.broadcast %cst_11 : f32 to vector<8x192xf32>
    %14 = arith.maximumf %12, %13 : vector<8x192xf32>
    %c0_12 = arith.constant 0 : index
    %c0_13 = arith.constant 0 : index
    %15 = vector.load %arg5[%c0_12, %c0_13] : memref<192x384xf32, #tpu.memory_space<vmem>>, vector<192x384xf32>
    %c0_14 = arith.constant 0 : index
    %c0_15 = arith.constant 0 : index
    %16 = vector.load %arg6[%c0_14, %c0_15] : memref<1x384xf32, #tpu.memory_space<vmem>>, vector<1x384xf32>
    %cst_16 = arith.constant dense<0.000000e+00> : vector<8x384xf32>
    %17 = tpu.matmul %14, %15, %cst_16 {dimension_numbers = #tpu.dot_dimension_numbers<[1], [0], [0], [1], [0, 0, 1, 1], [], []>} : vector<8x192xf32>, vector<192x384xf32>, vector<8x384xf32> -> vector<8x384xf32>
    %18 = vector.broadcast %16 : vector<1x384xf32> to vector<8x384xf32>
    %19 = arith.addf %17, %18 : vector<8x384xf32>
    %c0_17 = arith.constant 0 : index
    %c0_18 = arith.constant 0 : index
    %20 = vector.load %arg7[%c0_17, %c0_18] : memref<8x384xf32, #tpu.memory_space<vmem>>, vector<8x384xf32>
    tpu.vector_store %arg7[%c0_17, %c0_18], %19 {strides = array<i32>} : memref<8x384xf32, #tpu.memory_space<vmem>>, vector<8x384xf32>,
    return
  }
}

</mosaic_0001>

<llo_original>
// kernel: _lambda_.1
$region0: #{_lambda_.1}
  #allocation0 [shape = 'u32[]', space=smem, size = 0x4, offset = 0x4, fixed_abs, tag = 'smem constant byte address 0x4 - core index']
  #allocation1 [shape = 'u32[144,128]{1,0:T(1,128)}', space=vmem, size = 0x12000, scoped, tag = 'internal scratch']
  %s0 = inlined_call_operand.vmem [shape: f32[8,8], index: 0, kind: input, shape index: {}]
  %s1 = inlined_call_operand.vmem [shape: f32[8,192], index: 1, kind: input, shape index: {}]
  %s2 = inlined_call_operand.vmem [shape: f32[1,192], index: 2, kind: input, shape index: {}]
  %s3 = inlined_call_operand.hbm [shape: f32[192,192], index: 3, kind: input, shape index: {}]
  %s4 = inlined_call_operand.vmem [shape: f32[1,192], index: 4, kind: input, shape index: {}]
  %s5 = inlined_call_operand.hbm [shape: f32[192,384], index: 5, kind: input, shape index: {}]
  %s6 = inlined_call_operand.vmem [shape: f32[1,384], index: 6, kind: input, shape index: {}]
  %s7 = inlined_call_operand.vmem [shape: f32[8,384], index: 7, kind: output, shape index: {}]
  %s8 = sld [smem:[#allocation0]]
  $region46: #{_lambda_.1} parent=0
    _
  %s10 = ssub.s32 1, %s8
  %s11 = scalar_select 0, %s10, %s8
  $region1: #{_lambda_.1} parent=0
    #allocation2 [shape = 'u8[196608]{0}', space=vmem, size = 0x30000, scoped, tag = 'input window, operand 3, single buffered']
    #allocation3 [shape = 's32[1]{0}', space=sflag, size = 0x4, scoped, tag = 'scoped memory for _lambda_.1']
    #allocation4 [shape = 'u8[294912]{0}', space=vmem, size = 0x48000, scoped, tag = 'input window, operand 5, single buffered']
    #allocation5 [shape = 's32[1]{0}', space=sflag, size = 0x4, scoped, tag = 'scoped memory for _lambda_.1']
    %12 = vsyncpa [#allocation3], 0
    %13 = vsyncpa [#allocation5], 0
    // Predicated region
    $region2: #{_lambda_.1} parent=1 // pred_check
      _
    $region3: #{_lambda_.1} parent=1 // pred_check_branch
      %15 = sbr.rel (0) target = $region5
    $region4: #{_lambda_.1} parent=1 // pred_region
      _
    $region5: #{_lambda_.1} parent=1 // pred_fallthru
      _
    // Predicated region
    $region6: #{_lambda_.1} parent=1 // pred_check
      _
    $region7: #{_lambda_.1} parent=1 // pred_check_branch
      %17 = sbr.rel (0) target = $region9
    $region8: #{_lambda_.1} parent=1 // pred_region
      _
    $region9: #{_lambda_.1} parent=1 // pred_fallthru
      _
    // Predicated region
    $region10: #{_lambda_.1} parent=1 // pred_check
      _
    $region11: #{_lambda_.1} parent=1 // pred_check_branch
      %19 = sbr.rel (0) target = $region13
    $region12: #{_lambda_.1} parent=1 // pred_region
      _
    $region13: #{_lambda_.1} parent=1 // pred_fallthru
      _
    // Predicated region
    $region14: #{_lambda_.1} parent=1 // pred_check
      _
    $region15: #{_lambda_.1} parent=1 // pred_check_branch
      %21 = sbr.rel (0) target = $region17
    $region16: #{_lambda_.1} parent=1 // pred_region
      %s23 = ssub.s32 6144, 6144
      %24 = vsyncadd [#allocation3], %s23
      %s25 = sshll.u32 [#allocation2], 4
      %s26 = int_to_ptr.vmem [resolvable:$true] %s25
      %31 = dma.hbm_to_vmem [thread:$0]  %s3, 6144, %s26, [#allocation3], 256, 256, 16
    $region17: #{_lambda_.1} parent=1 // pred_fallthru
      _
    // Predicated region
    $region18: #{_lambda_.1} parent=1 // pred_check
      _
    $region19: #{_lambda_.1} parent=1 // pred_check_branch
      %33 = sbr.rel (0) target = $region21
    $region20: #{_lambda_.1} parent=1 // pred_region
      _
    $region21: #{_lambda_.1} parent=1 // pred_fallthru
      _
    // Predicated region
    $region22: #{_lambda_.1} parent=1 // pred_check
      _
    $region23: #{_lambda_.1} parent=1 // pred_check_branch
      %35 = sbr.rel (0) target = $region25
    $region24: #{_lambda_.1} parent=1 // pred_region
      %s37 = ssub.s32 9216, 9216
      %38 = vsyncadd [#allocation5], %s37
      %s39 = sshll.u32 [#allocation4], 4
      %s40 = int_to_ptr.vmem [resolvable:$true] %s39
      %45 = dma.hbm_to_vmem [thread:$0]  %s5, 9216, %s40, [#allocation5], 384, 384, 24
    $region25: #{_lambda_.1} parent=1 // pred_fallthru
      _
    // Predicated region
    $region26: #{_lambda_.1} parent=1 // pred_check
      _
    $region27: #{_lambda_.1} parent=1 // pred_check_branch
      %47 = sbr.rel (0) target = $region29
    $region28: #{_lambda_.1} parent=1 // pred_region
      _
    $region29: #{_lambda_.1} parent=1 // pred_fallthru
      _
    // Predicated region
    $region30: #{_lambda_.1} parent=1 // pred_check
      _
    $region31: #{_lambda_.1} parent=1 // pred_check_branch
      %49 = sbr.rel (0) target = $region33
    $region32: #{_lambda_.1} parent=1 // pred_region
      %50 = dma.done [#allocation3], 6144
    $region33: #{_lambda_.1} parent=1 // pred_fallthru
      _
    // Predicated region
    $region34: #{_lambda_.1} parent=1 // pred_check
      _
    $region35: #{_lambda_.1} parent=1 // pred_check_branch
      %52 = sbr.rel (0) target = $region37
    $region36: #{_lambda_.1} parent=1 // pred_region
      %53 = dma.done [#allocation5], 9216
    $region37: #{_lambda_.1} parent=1 // pred_fallthru
      _
    %v54 = vld [vmem:[%s0] sm:$0xff]
    %v55 = vld [vmem:[%s1] sm:$0xff]
    %v56 = vld [vmem:[%s1 + $0x8] sm:$0xff]
    %v57 = vld [vmem:[%s2] sm:$0x3]
    %v59 = vlaneseq
    %v60 = vshrl.u32 %v59, 7
    %v61 = vsub.s32 0, %v60
    %v62 = vrot.slane %v57, %v61
    %v63 = vlaneseq
    %v64 = vshrl.u32 %v63, 7
    %v65 = vsub.s32 1, %v64
    %v66 = vrot.slane %v57, %v65
    %vm69 = vcmask 64512
    %v71 = vsel %vm69, %v54, 0
    %73 = vmatprep.subr.mxu0 %v56
    %74 = vmatpush1.msra.mxu0 %v55
    %75 = vmatprep.subr.mxu0 0.0
    %76 = vmatpush1.msra.mxu0 0.0
    %77 = vmatprep.subr.mxu0 0.0
    %78 = vmatpush1.msra.mxu0 0.0
    %79 = vmatprep.subr.mxu0 0.0
    %80 = vmatpush1.msra.mxu0 0.0
    %81 = vmatprep.subr.mxu0 0.0
    %82 = vmatpush1.msra.mxu0 0.0
    %83 = vmatprep.subr.mxu0 0.0
    %84 = vmatpush1.msra.mxu0 0.0
    %85 = vmatprep.subr.mxu0 0.0
    %86 = vmatpush1.msra.mxu0 0.0
    %87 = vmatprep.subr.mxu0 0.0
    %88 = vmatpush1.msra.mxu0 0.0
    %89 = vmatprep.subr.mxu0 0.0
    %90 = vmatpush1.msra.mxu0 0.0
    %91 = vmatprep.subr.mxu0 0.0
    %92 = vmatpush1.msra.mxu0 0.0
    %93 = vmatprep.subr.mxu0 0.0
    %94 = vmatpush1.msra.mxu0 0.0
    %95 = vmatprep.subr.mxu0 0.0
    %96 = vmatpush1.msra.mxu0 0.0
    %97 = vmatprep.subr.mxu0 0.0
    %98 = vmatpush1.msra.mxu0 0.0
    %99 = vmatprep.subr.mxu0 0.0
    %100 = vmatpush1.msra.mxu0 0.0
    %101 = vmatprep.subr.mxu0 0.0
    %102 = vmatpush1.msra.mxu0 0.0
    %103 = vmatprep.subr.mxu0 0.0
    %104 = vmatpush1.msra.mxu0 0.0
    %105 = vmatprep.subr.mxu0 0.0
    %106 = vmatpush1.msra.mxu0 0.0
    %107 = vmatprep.subr.mxu0 0.0
    %108 = vmatpush1.msra.mxu0 0.0
    %109 = vmatprep.subr.mxu0 0.0
    %110 = vmatpush1.msra.mxu0 0.0
    %111 = vmatprep.subr.mxu0 0.0
    %112 = vmatpush1.msra.mxu0 0.0
    %113 = vmatprep.subr.mxu0 0.0
    %114 = vmatpush1.msra.mxu0 0.0
    %115 = vmatprep.subr.mxu0 0.0
    %116 = vmatpush1.msra.mxu0 0.0
    %117 = vmatprep.subr.mxu0 0.0
    %118 = vmatpush1.msra.mxu0 0.0
    %119 = vmatprep.subr.mxu0 0.0
    %120 = vmatpush1.msra.mxu0 0.0
    %121 = vmatprep.subr.mxu0 0.0
    %122 = vmatpush1.msra.mxu0 0.0
    %123 = vmatprep.subr.mxu0 0.0
    %124 = vmatpush1.msra.mxu0 0.0
    %125 = vmatprep.subr.mxu0 0.0
    %126 = vmatpush1.msra.mxu0 0.0
    %127 = vmatprep.subr.mxu0 0.0
    %128 = vmatpush1.msra.mxu0 0.0
    %129 = vmatprep.subr.mxu0 0.0
    %130 = vmatpush1.msra.mxu0 0.0
    %131 = vmatprep.subr.mxu0 0.0
    %132 = vmatpush1.msra.mxu0 0.0
    %133 = vmatprep.subr.mxu0 0.0
    %134 = vmatpush1.msra.mxu0 0.0
    %135 = vmatprep.subr.mxu0 0.0
    %136 = vmatpush1.msra.mxu0 0.0
    %137 = vmatprep.mubr.f32.mxu0 0.0
    %138 = vmatmul.mubr.f32.gmra.mrb[0].mxu0 %v71
    %v139 = vpop.f32.mrb[0].mxu0
    %v140 = vadd.f32 %v62, %v139
    %v141 = vpop.f32.mrb[0].mxu0
    %v142 = vadd.f32 %v66, %v141
    %143 = vdwg.mxu0
    %v144 = vmax.f32 %v140, 0.0
    %v145 = vmax.f32 %v142, 0.0
    %v146 = vld [vmem:[#allocation2] sm:$0xff]
    %v147 = vld [vmem:[#allocation2 + $0x8] sm:$0xff]
    %v148 = vld [vmem:[#allocation2 + $0x10] sm:$0xff]
    %v149 = vld [vmem:[#allocation2 + $0x18] sm:$0xff]
    %v150 = vld [vmem:[#allocation2 + $0x20] sm:$0xff]
    %v151 = vld [vmem:[#allocation2 + $0x28] sm:$0xff]
    %v152 = vld [vmem:[#allocation2 + $0x30] sm:$0xff]
    %v153 = vld [vmem:[#allocation2 + $0x38] sm:$0xff]
    %v154 = vld [vmem:[#allocation2 + $0x40] sm:$0xff]
    %v155 = vld [vmem:[#allocation2 + $0x48] sm:$0xff]
    %v156 = vld [vmem:[#allocation2 + $0x50] sm:$0xff]
    %v157 = vld [vmem:[#allocation2 + $0x58] sm:$0xff]
    %v158 = vld [vmem:[#allocation2 + $0x60] sm:$0xff]
    %v159 = vld [vmem:[#allocation2 + $0x68] sm:$0xff]
    %v160 = vld [vmem:[#allocation2 + $0x70] sm:$0xff]
    %v161 = vld [vmem:[#allocation2 + $0x78] sm:$0xff]
    %v162 = vld [vmem:[#allocation2 + $0x80] sm:$0xff]
    %v163 = vld [vmem:[#allocation2 + $0x88] sm:$0xff]
    %v164 = vld [vmem:[#allocation2 + $0x90] sm:$0xff]
    %v165 = vld [vmem:[#allocation2 + $0x98] sm:$0xff]
    %v166 = vld [vmem:[#allocation2 + $0xa0] sm:$0xff]
    %v167 = vld [vmem:[#allocation2 + $0xa8] sm:$0xff]
    %v168 = vld [vmem:[#allocation2 + $0xb0] sm:$0xff]
    %v169 = vld [vmem:[#allocation2 + $0xb8] sm:$0xff]
    %v170 = vld [vmem:[#allocation2 + $0xc0] sm:$0xff]
    %v171 = vld [vmem:[#allocation2 + $0xc8] sm:$0xff]
    %v172 = vld [vmem:[#allocation2 + $0xd0] sm:$0xff]
    %v173 = vld [vmem:[#allocation2 + $0xd8] sm:$0xff]
    %v174 = vld [vmem:[#allocation2 + $0xe0] sm:$0xff]
    %v175 = vld [vmem:[#allocation2 + $0xe8] sm:$0xff]
    %v176 = vld [vmem:[#allocation2 + $0xf0] sm:$0xff]
    %v177 = vld [vmem:[#allocation2 + $0xf8] sm:$0xff]
    %v178 = vld [vmem:[#allocation2 + $0x100] sm:$0xff]
    %v179 = vld [vmem:[#allocation2 + $0x108] sm:$0xff]
    %v180 = vld [vmem:[#allocation2 + $0x110] sm:$0xff]
    %v181 = vld [vmem:[#allocation2 + $0x118] sm:$0xff]
    %v182 = vld [vmem:[#allocation2 + $0x120] sm:$0xff]
    %v183 = vld [vmem:[#allocation2 + $0x128] sm:$0xff]
    %v184 = vld [vmem:[#allocation2 + $0x130] sm:$0xff]
    %v185 = vld [vmem:[#allocation2 + $0x138] sm:$0xff]
    %v186 = vld [vmem:[#allocation2 + $0x140] sm:$0xff]
    %v187 = vld [vmem:[#allocation2 + $0x148] sm:$0xff]
    %v188 = vld [vmem:[#allocation2 + $0x150] sm:$0xff]
    %v189 = vld [vmem:[#allocation2 + $0x158] sm:$0xff]
    %v190 = vld [vmem:[#allocation2 + $0x160] sm:$0xff]
    %v191 = vld [vmem:[#allocation2 + $0x168] sm:$0xff]
    %v192 = vld [vmem:[#allocation2 + $0x170] sm:$0xff]
    %v193 = vld [vmem:[#allocation2 + $0x178] sm:$0xff]
    %v194 = vld [vmem:[%s4] sm:$0x3]
    %v196 = vlaneseq
    %v197 = vshrl.u32 %v196, 7
    %v198 = vsub.s32 0, %v197
    %v199 = vrot.slane %v194, %v198
    %v200 = vlaneseq
    %v201 = vshrl.u32 %v200, 7
    %v202 = vsub.s32 1, %v201
    %v203 = vrot.slane %v194, %v202
    %vm206 = vcmask 523264
    %v208 = vsel %vm206, %v145, 0
    %210 = vmatprep.subr.mxu0 %v147
    %211 = vmatpush1.msra.mxu0 %v146
    %212 = vmatprep.subr.mxu0 %v149
    %213 = vmatpush1.msra.mxu0 %v148
    %214 = vmatprep.subr.mxu0 %v151
    %215 = vmatpush1.msra.mxu0 %v150
    %216 = vmatprep.subr.mxu0 %v153
    %217 = vmatpush1.msra.mxu0 %v152
    %218 = vmatprep.subr.mxu0 %v155
    %219 = vmatpush1.msra.mxu0 %v154
    %220 = vmatprep.subr.mxu0 %v157
    %221 = vmatpush1.msra.mxu0 %v156
    %222 = vmatprep.subr.mxu0 %v159
    %223 = vmatpush1.msra.mxu0 %v158
    %224 = vmatprep.subr.mxu0 %v161
    %225 = vmatpush1.msra.mxu0 %v160
    %226 = vmatprep.subr.mxu0 %v163
    %227 = vmatpush1.msra.mxu0 %v162
    %228 = vmatprep.subr.mxu0 %v165
    %229 = vmatpush1.msra.mxu0 %v164
    %230 = vmatprep.subr.mxu0 %v167
    %231 = vmatpush1.msra.mxu0 %v166
    %232 = vmatprep.subr.mxu0 %v169
    %233 = vmatpush1.msra.mxu0 %v168
    %234 = vmatprep.subr.mxu0 %v171
    %235 = vmatpush1.msra.mxu0 %v170
    %236 = vmatprep.subr.mxu0 %v173
    %237 = vmatpush1.msra.mxu0 %v172
    %238 = vmatprep.subr.mxu0 %v175
    %239 = vmatpush1.msra.mxu0 %v174
    %240 = vmatprep.subr.mxu0 %v177
    %241 = vmatpush1.msra.mxu0 %v176
    %242 = vmatprep.subr.mxu0 %v179
    %243 = vmatpush1.msra.mxu0 %v178
    %244 = vmatprep.subr.mxu0 %v181
    %245 = vmatpush1.msra.mxu0 %v180
    %246 = vmatprep.subr.mxu0 %v183
    %247 = vmatpush1.msra.mxu0 %v182
    %248 = vmatprep.subr.mxu0 %v185
    %249 = vmatpush1.msra.mxu0 %v184
    %250 = vmatprep.subr.mxu0 %v187
    %251 = vmatpush1.msra.mxu0 %v186
    %252 = vmatprep.subr.mxu0 %v189
    %253 = vmatpush1.msra.mxu0 %v188
    %254 = vmatprep.subr.mxu0 %v191
    %255 = vmatpush1.msra.mxu0 %v190
    %256 = vmatprep.subr.mxu0 %v193
    %257 = vmatpush1.msra.mxu0 %v192
    %258 = vmatprep.subr.mxu0 0.0
    %259 = vmatpush1.msra.mxu0 0.0
    %260 = vmatprep.subr.mxu0 0.0
    %261 = vmatpush1.msra.mxu0 0.0
    %262 = vmatprep.subr.mxu0 0.0
    %263 = vmatpush1.msra.mxu0 0.0
    %264 = vmatprep.subr.mxu0 0.0
    %265 = vmatpush1.msra.mxu0 0.0
    %266 = vmatprep.subr.mxu0 0.0
    %267 = vmatpush1.msra.mxu0 0.0
    %268 = vmatprep.subr.mxu0 0.0
    %269 = vmatpush1.msra.mxu0 0.0
    %270 = vmatprep.subr.mxu0 0.0
    %271 = vmatpush1.msra.mxu0 0.0
    %272 = vmatprep.subr.mxu0 0.0
    %273 = vmatpush1.msra.mxu0 0.0
    %274 = vmatprep.mubr.f32.mxu0 %v208
    %275 = vmatmul.mubr.f32.gmra.mrb[0].mxu0 %v144
    %v276 = vpop.f32.mrb[0].mxu0
    %v277 = vadd.f32 %v199, %v276
    %v278 = vpop.f32.mrb[0].mxu0
    %v279 = vadd.f32 %v203, %v278
    %280 = vdwg.mxu0
    %v281 = vmax.f32 %v277, 0.0
    %v282 = vmax.f32 %v279, 0.0
    %v283 = vld [vmem:[#allocation4] sm:$0xff]
    %v284 = vld [vmem:[#allocation4 + $0x8] sm:$0xff]
    %v285 = vld [vmem:[#allocation4 + $0x10] sm:$0xff]
    %v286 = vld [vmem:[#allocation4 + $0x18] sm:$0xff]
    %v287 = vld [vmem:[#allocation4 + $0x20] sm:$0xff]
    %v288 = vld [vmem:[#allocation4 + $0x28] sm:$0xff]
    %v289 = vld [vmem:[#allocation4 + $0x30] sm:$0xff]
    %v290 = vld [vmem:[#allocation4 + $0x38] sm:$0xff]
    %v291 = vld [vmem:[#allocation4 + $0x40] sm:$0xff]
    %v292 = vld [vmem:[#allocation4 + $0x48] sm:$0xff]
    %v293 = vld [vmem:[#allocation4 + $0x50] sm:$0xff]
    %v294 = vld [vmem:[#allocation4 + $0x58] sm:$0xff]
    %v295 = vld [vmem:[#allocation4 + $0x60] sm:$0xff]
    %v296 = vld [vmem:[#allocation4 + $0x68] sm:$0xff]
    %v297 = vld [vmem:[#allocation4 + $0x70] sm:$0xff]
    %v298 = vld [vmem:[#allocation4 + $0x78] sm:$0xff]
    %v299 = vld [vmem:[#allocation4 + $0x80] sm:$0xff]
    %v300 = vld [vmem:[#allocation4 + $0x88] sm:$0xff]
    %v301 = vld [vmem:[#allocation4 + $0x90] sm:$0xff]
    %v302 = vld [vmem:[#allocation4 + $0x98] sm:$0xff]
    %v303 = vld [vmem:[#allocation4 + $0xa0] sm:$0xff]
    %v304 = vld [vmem:[#allocation4 + $0xa8] sm:$0xff]
    %v305 = vld [vmem:[#allocation4 + $0xb0] sm:$0xff]
    %v306 = vld [vmem:[#allocation4 + $0xb8] sm:$0xff]
    %v307 = vld [vmem:[#allocation4 + $0xc0] sm:$0xff]
    %v308 = vld [vmem:[#allocation4 + $0xc8] sm:$0xff]
    %v309 = vld [vmem:[#allocation4 + $0xd0] sm:$0xff]
    %v310 = vld [vmem:[#allocation4 + $0xd8] sm:$0xff]
    %v311 = vld [vmem:[#allocation4 + $0xe0] sm:$0xff]
    %v312 = vld [vmem:[#allocation4 + $0xe8] sm:$0xff]
    %v313 = vld [vmem:[#allocation4 + $0xf0] sm:$0xff]
    %v314 = vld [vmem:[#allocation4 + $0xf8] sm:$0xff]
    %v315 = vld [vmem:[#allocation4 + $0x100] sm:$0xff]
    %v316 = vld [vmem:[#allocation4 + $0x108] sm:$0xff]
    %v317 = vld [vmem:[#allocation4 + $0x110] sm:$0xff]
    %v318 = vld [vmem:[#allocation4 + $0x118] sm:$0xff]
    %v319 = vld [vmem:[#allocation4 + $0x120] sm:$0xff]
    %v320 = vld [vmem:[#allocation4 + $0x128] sm:$0xff]
    %v321 = vld [vmem:[#allocation4 + $0x130] sm:$0xff]
    %v322 = vld [vmem:[#allocation4 + $0x138] sm:$0xff]
    %v323 = vld [vmem:[#allocation4 + $0x140] sm:$0xff]
    %v324 = vld [vmem:[#allocation4 + $0x148] sm:$0xff]
    %v325 = vld [vmem:[#allocation4 + $0x150] sm:$0xff]
    %v326 = vld [vmem:[#allocation4 + $0x158] sm:$0xff]
    %v327 = vld [vmem:[#allocation4 + $0x160] sm:$0xff]
    %v328 = vld [vmem:[#allocation4 + $0x168] sm:$0xff]
    %v329 = vld [vmem:[#allocation4 + $0x170] sm:$0xff]
    %v330 = vld [vmem:[#allocation4 + $0x178] sm:$0xff]
    %v331 = vld [vmem:[#allocation4 + $0x180] sm:$0xff]
    %v332 = vld [vmem:[#allocation4 + $0x188] sm:$0xff]
    %v333 = vld [vmem:[#allocation4 + $0x190] sm:$0xff]
    %v334 = vld [vmem:[#allocation4 + $0x198] sm:$0xff]
    %v335 = vld [vmem:[#allocation4 + $0x1a0] sm:$0xff]
    %v336 = vld [vmem:[#allocation4 + $0x1a8] sm:$0xff]
    %v337 = vld [vmem:[#allocation4 + $0x1b0] sm:$0xff]
    %v338 = vld [vmem:[#allocation4 + $0x1b8] sm:$0xff]
    %v339 = vld [vmem:[#allocation4 + $0x1c0] sm:$0xff]
    %v340 = vld [vmem:[#allocation4 + $0x1c8] sm:$0xff]
    %v341 = vld [vmem:[#allocation4 + $0x1d0] sm:$0xff]
    %v342 = vld [vmem:[#allocation4 + $0x1d8] sm:$0xff]
    %v343 = vld [vmem:[#allocation4 + $0x1e0] sm:$0xff]
    %v344 = vld [vmem:[#allocation4 + $0x1e8] sm:$0xff]
    %v345 = vld [vmem:[#allocation4 + $0x1f0] sm:$0xff]
    %v346 = vld [vmem:[#allocation4 + $0x1f8] sm:$0xff]
    %v347 = vld [vmem:[#allocation4 + $0x200] sm:$0xff]
    %v348 = vld [vmem:[#allocation4 + $0x208] sm:$0xff]
    %v349 = vld [vmem:[#allocation4 + $0x210] sm:$0xff]
    %v350 = vld [vmem:[#allocation4 + $0x218] sm:$0xff]
    %v351 = vld [vmem:[#allocation4 + $0x220] sm:$0xff]
    %v352 = vld [vmem:[#allocation4 + $0x228] sm:$0xff]
    %v353 = vld [vmem:[#allocation4 + $0x230] sm:$0xff]
    %v354 = vld [vmem:[#allocation4 + $0x238] sm:$0xff]
    %v355 = vld [vmem:[%s6] sm:$0x7]
    %v357 = vlaneseq
    %v358 = vshrl.u32 %v357, 7
    %v359 = vsub.s32 0, %v358
    %v360 = vrot.slane %v355, %v359
    %v361 = vlaneseq
    %v362 = vshrl.u32 %v361, 7
    %v363 = vsub.s32 1, %v362
    %v364 = vrot.slane %v355, %v363
    %v365 = vlaneseq
    %v366 = vshrl.u32 %v365, 7
    %v367 = vsub.s32 2, %v366
    %v368 = vrot.slane %v355, %v367
    %v373 = vsel %vm206, %v282, 0
    %375 = vmatprep.subr.mxu0 %v284
    %376 = vmatpush1.msra.mxu0 %v283
    %377 = vmatprep.subr.mxu0 %v287
    %378 = vmatpush1.msra.mxu0 %v286
    %379 = vmatprep.subr.mxu0 %v290
    %380 = vmatpush1.msra.mxu0 %v289
    %381 = vmatprep.subr.mxu0 %v293
    %382 = vmatpush1.msra.mxu0 %v292
    %383 = vmatprep.subr.mxu0 %v296
    %384 = vmatpush1.msra.mxu0 %v295
    %385 = vmatprep.subr.mxu0 %v299
    %386 = vmatpush1.msra.mxu0 %v298
    %387 = vmatprep.subr.mxu0 %v302
    %388 = vmatpush1.msra.mxu0 %v301
    %389 = vmatprep.subr.mxu0 %v305
    %390 = vmatpush1.msra.mxu0 %v304
    %391 = vmatprep.subr.mxu0 %v308
    %392 = vmatpush1.msra.mxu0 %v307
    %393 = vmatprep.subr.mxu0 %v311
    %394 = vmatpush1.msra.mxu0 %v310
    %395 = vmatprep.subr.mxu0 %v314
    %396 = vmatpush1.msra.mxu0 %v313
    %397 = vmatprep.subr.mxu0 %v317
    %398 = vmatpush1.msra.mxu0 %v316
    %399 = vmatprep.subr.mxu0 %v320
    %400 = vmatpush1.msra.mxu0 %v319
    %401 = vmatprep.subr.mxu0 %v323
    %402 = vmatpush1.msra.mxu0 %v322
    %403 = vmatprep.subr.mxu0 %v326
    %404 = vmatpush1.msra.mxu0 %v325
    %405 = vmatprep.subr.mxu0 %v329
    %406 = vmatpush1.msra.mxu0 %v328
    %407 = vmatprep.subr.mxu0 %v332
    %408 = vmatpush1.msra.mxu0 %v331
    %409 = vmatprep.subr.mxu0 %v335
    %410 = vmatpush1.msra.mxu0 %v334
    %411 = vmatprep.subr.mxu0 %v338
    %412 = vmatpush1.msra.mxu0 %v337
    %413 = vmatprep.subr.mxu0 %v341
    %414 = vmatpush1.msra.mxu0 %v340
    %415 = vmatprep.subr.mxu0 %v344
    %416 = vmatpush1.msra.mxu0 %v343
    %417 = vmatprep.subr.mxu0 %v347
    %418 = vmatpush1.msra.mxu0 %v346
    %419 = vmatprep.subr.mxu0 %v350
    %420 = vmatpush1.msra.mxu0 %v349
    %421 = vmatprep.subr.mxu0 %v353
    %422 = vmatpush1.msra.mxu0 %v352
    %423 = vmatprep.subr.mxu0 0.0
    %424 = vmatpush1.msra.mxu0 0.0
    %425 = vmatprep.subr.mxu0 0.0
    %426 = vmatpush1.msra.mxu0 0.0
    %427 = vmatprep.subr.mxu0 0.0
    %428 = vmatpush1.msra.mxu0 0.0
    %429 = vmatprep.subr.mxu0 0.0
    %430 = vmatpush1.msra.mxu0 0.0
    %431 = vmatprep.subr.mxu0 0.0
    %432 = vmatpush1.msra.mxu0 0.0
    %433 = vmatprep.subr.mxu0 0.0
    %434 = vmatpush1.msra.mxu0 0.0
    %435 = vmatprep.subr.mxu0 0.0
    %436 = vmatpush1.msra.mxu0 0.0
    %437 = vmatprep.subr.mxu0 0.0
    %438 = vmatpush1.msra.mxu0 0.0
    %439 = vmatprep.mubr.f32.mxu0 %v373
    %440 = vmatmul.mubr.f32.gmra.mrb[0].mxu0 %v281
    %v441 = vpop.f32.mrb[0].mxu0
    %v442 = vadd.f32 %v360, %v441
    %v443 = vpop.f32.mrb[0].mxu0
    %v444 = vadd.f32 %v364, %v443
    %445 = vdwg.mxu0
    %446 = vmatprep.subr.mxu0 0.0
    %447 = vmatpush1.msra.mxu0 %v285
    %448 = vmatprep.subr.mxu0 0.0
    %449 = vmatpush1.msra.mxu0 %v288
    %450 = vmatprep.subr.mxu0 0.0
    %451 = vmatpush1.msra.mxu0 %v291
    %452 = vmatprep.subr.mxu0 0.0
    %453 = vmatpush1.msra.mxu0 %v294
    %454 = vmatprep.subr.mxu0 0.0
    %455 = vmatpush1.msra.mxu0 %v297
    %456 = vmatprep.subr.mxu0 0.0
    %457 = vmatpush1.msra.mxu0 %v300
    %458 = vmatprep.subr.mxu0 0.0
    %459 = vmatpush1.msra.mxu0 %v303
    %460 = vmatprep.subr.mxu0 0.0
    %461 = vmatpush1.msra.mxu0 %v306
    %462 = vmatprep.subr.mxu0 0.0
    %463 = vmatpush1.msra.mxu0 %v309
    %464 = vmatprep.subr.mxu0 0.0
    %465 = vmatpush1.msra.mxu0 %v312
    %466 = vmatprep.subr.mxu0 0.0
    %467 = vmatpush1.msra.mxu0 %v315
    %468 = vmatprep.subr.mxu0 0.0
    %469 = vmatpush1.msra.mxu0 %v318
    %470 = vmatprep.subr.mxu0 0.0
    %471 = vmatpush1.msra.mxu0 %v321
    %472 = vmatprep.subr.mxu0 0.0
    %473 = vmatpush1.msra.mxu0 %v324
    %474 = vmatprep.subr.mxu0 0.0
    %475 = vmatpush1.msra.mxu0 %v327
    %476 = vmatprep.subr.mxu0 0.0
    %477 = vmatpush1.msra.mxu0 %v330
    %478 = vmatprep.subr.mxu0 0.0
    %479 = vmatpush1.msra.mxu0 %v333
    %480 = vmatprep.subr.mxu0 0.0
    %481 = vmatpush1.msra.mxu0 %v336
    %482 = vmatprep.subr.mxu0 0.0
    %483 = vmatpush1.msra.mxu0 %v339
    %484 = vmatprep.subr.mxu0 0.0
    %485 = vmatpush1.msra.mxu0 %v342
    %486 = vmatprep.subr.mxu0 0.0
    %487 = vmatpush1.msra.mxu0 %v345
    %488 = vmatprep.subr.mxu0 0.0
    %489 = vmatpush1.msra.mxu0 %v348
    %490 = vmatprep.subr.mxu0 0.0
    %491 = vmatpush1.msra.mxu0 %v351
    %492 = vmatprep.subr.mxu0 0.0
    %493 = vmatpush1.msra.mxu0 %v354
    %494 = vmatprep.subr.mxu0 0.0
    %495 = vmatpush1.msra.mxu0 0.0
    %496 = vmatprep.subr.mxu0 0.0
    %497 = vmatpush1.msra.mxu0 0.0
    %498 = vmatprep.subr.mxu0 0.0
    %499 = vmatpush1.msra.mxu0 0.0
    %500 = vmatprep.subr.mxu0 0.0
    %501 = vmatpush1.msra.mxu0 0.0
    %502 = vmatprep.subr.mxu0 0.0
    %503 = vmatpush1.msra.mxu0 0.0
    %504 = vmatprep.subr.mxu0 0.0
    %505 = vmatpush1.msra.mxu0 0.0
    %506 = vmatprep.subr.mxu0 0.0
    %507 = vmatpush1.msra.mxu0 0.0
    %508 = vmatprep.subr.mxu0 0.0
    %509 = vmatpush1.msra.mxu0 0.0
    %510 = vmatprep.mubr.f32.mxu0 %v373
    %511 = vmatmul.mubr.f32.gmra.mrb[0].mxu0 %v281
    %v512 = vpop.f32.mrb[0].mxu0
    %v513 = vadd.f32 %v368, %v512
    %v514 = vpop.f32.mrb[0].mxu0
    %515 = vdwg.mxu0
    %516 = vst [vmem:[%s7] sm:$0xff] %v442
    %517 = vst [vmem:[%s7 + $0x8] sm:$0xff] %v444
    %518 = vst [vmem:[%s7 + $0x10] sm:$0xff] %v513
    // Predicated region
    $region38: #{_lambda_.1} parent=1 // pred_check
      _
    $region39: #{_lambda_.1} parent=1 // pred_check_branch
      %520 = sbr.rel (0) target = $region41
    $region40: #{_lambda_.1} parent=1 // pred_region
      _
    $region41: #{_lambda_.1} parent=1 // pred_fallthru
      _
    // Predicated region
    $region42: #{_lambda_.1} parent=1 // pred_check
      _
    $region43: #{_lambda_.1} parent=1 // pred_check_branch
      %522 = sbr.rel (0) target = $region45
    $region44: #{_lambda_.1} parent=1 // pred_region
      _
    $region45: #{_lambda_.1} parent=1 // pred_fallthru
      _
    %523 = vsyncpa [#allocation3], 1
    %524 = vsyncpa [#allocation5], 1

</llo_original>
